<compile_context>
chip_gen: v7x
topology: tpu7x:2x2x1
jax: 0.10.0
libtpu: 0.0.40
codegen_flags: <defaults>
</compile_context>

<pallas_src>
import functools

import jax
import jax.numpy as jnp
from jax.experimental import pallas as pl
from jax.experimental.pallas import tpu as pltpu


def _round_up(x: int, m: int) -> int:
    return ((x + m - 1) // m) * m


def _time_slot_kernel(t_ref, emb_ref, out_ref, *, max_time, time_num):
    # t_ref:   (TB, 1) f32 block of timestamps
    # emb_ref: (time_num, D) embedding table (VMEM-resident, constant index_map)
    # out_ref: (TB, D) output block
    t = t_ref[...]                                               # (TB, 1)

    # Exact two-op form -> bit-identical truncation vs. the PyTorch module.
    idx = (t / max_time * (time_num - 1)).astype(jnp.int32)      # trunc toward 0
    # Explicit behavior for out-of-range timestamps (torch would index-error).
    idx = jnp.clip(idx, 0, time_num - 1)                         # (TB, 1)

    # One-hot gather on the MXU.  lane_ids is only (1, time_num); broadcasting
    # against idx (TB, 1) avoids rebuilding a (TB, time_num) iota per step.
    lane_ids = jax.lax.broadcasted_iota(jnp.int32, (1, time_num), 1)
    onehot = (lane_ids == idx).astype(emb_ref.dtype)             # (TB, time_num)

    out_ref[...] = jnp.dot(
        onehot, emb_ref[...], preferred_element_type=jnp.float32
    ).astype(out_ref.dtype)


def time_slot_encoder(t, emb_table, *, max_time, time_num, block_b=512):
    """t: (B,) float timestamps, emb_table: (time_num, D) -> (B, D)."""
    B = int(t.shape[0])
    D = int(emb_table.shape[1])
    t2 = t.astype(jnp.float32).reshape(B, 1)

    # Batch tile: multiple of 8 sublanes, capped at block_b (512-1024 range is
    # where streamed tiles reach ~85% of HBM roofline for big B).
    tb = min(int(block_b), _round_up(B, 8))
    tb = _round_up(tb, 8)
    b_pad = _round_up(B, tb)
    if b_pad != B:
        # Pad with t=0 -> slot 0 (valid row); padded rows are sliced off below.
        t2 = jnp.pad(t2, ((0, b_pad - B), (0, 0)))

    kernel = functools.partial(
        _time_slot_kernel, max_time=float(max_time), time_num=int(time_num)
    )

    out = pl.pallas_call(
        kernel,
        out_shape=jax.ShapeDtypeStruct((b_pad, D), emb_table.dtype),
        grid=(b_pad // tb,),
        in_specs=[
            # Streamed timestamp blocks.
            pl.BlockSpec((tb, 1), lambda i: (i, 0)),
            # Full table, constant block index -> loaded once, stays in VMEM.
            pl.BlockSpec((int(time_num), D), lambda i: (0, 0)),
        ],
        out_specs=pl.BlockSpec((tb, D), lambda i: (i, 0)),
        compiler_params=pltpu.CompilerParams(
            dimension_semantics=("parallel",),
        ),
    )(t2, emb_table)

    return out[:B]


if __name__ == "__main__":
    # Module hyper-params (small, consistent with __init__ signature)
    dimension = 32
    max_time = 100.0
    time_num = 16
    batch = 40          # not a multiple of the block -> exercises padding
    block_b = 16        # small block so the demo runs a 3-step grid

    key = jax.random.PRNGKey(0)
    k_emb, k_t = jax.random.split(key)

    # nn.Embedding default init: N(0, 1)
    emb_table = jax.random.normal(k_emb, (time_num, dimension), dtype=jnp.float32)
    # timestamps in [0, max_time)
    t = jax.random.uniform(k_t, (batch,), dtype=jnp.float32, maxval=max_time)

    out = time_slot_encoder(
        t, emb_table, max_time=max_time, time_num=time_num, block_b=block_b
    )
    out = jax.block_until_ready(out)

    # Pure-JAX reference matching the PyTorch forward exactly (in-range inputs)
    idx_ref = (t / max_time * (time_num - 1)).astype(jnp.int32)
    ref = jnp.take(emb_table, idx_ref, axis=0)

    assert out.shape == (batch, dimension)
    assert jnp.allclose(out, ref, atol=1e-6), "mismatch vs reference"
    print("KERNEL_OK")
</pallas_src>

<mosaic_0001>
module attributes {stable_mosaic.version = 11 : i64} {
  func.func @_time_slot_kernel(%arg0: i32, %arg1: memref<16x1xf32, #tpu.memory_space<vmem>>, %arg2: memref<16x32xf32, #tpu.memory_space<vmem>>, %arg3: memref<16x32xf32, #tpu.memory_space<vmem>>) attributes {dimension_semantics = [#tpu.dimension_semantics<parallel>], iteration_bounds = array<i64: 3>, scalar_prefetch = 0 : i64, scratch_operands = 0 : i64, tpu.core_type = #tpu.core_type<tc>, window_params = [{transform_indices = @transform_0, window_bounds = array<i64: 16, 1>}, {pipeline_mode = #tpu.pipeline_mode<synchronous>, transform_indices = @transform_1, window_bounds = array<i64: 16, 32>}, {transform_indices = @transform_2, window_bounds = array<i64: 16, 32>}]} {
    %c0 = arith.constant 0 : index
    %c0_0 = arith.constant 0 : index
    %0 = vector.load %arg1[%c0, %c0_0] : memref<16x1xf32, #tpu.memory_space<vmem>>, vector<16x1xf32>
    %cst = arith.constant 1.000000e+02 : f32
    %1 = vector.broadcast %cst : f32 to vector<16x1xf32>
    %2 = arith.divf %0, %1 : vector<16x1xf32>
    %cst_1 = arith.constant 1.500000e+01 : f32
    %3 = vector.broadcast %cst_1 : f32 to vector<16x1xf32>
    %4 = arith.mulf %2, %3 : vector<16x1xf32>
    %5 = arith.fptosi %4 : vector<16x1xf32> to vector<16x1xi32>
    %c0_i32 = arith.constant 0 : i32
    %c15_i32 = arith.constant 15 : i32
    %6 = vector.broadcast %c0_i32 : i32 to vector<16x1xi32>
    %7 = arith.maxsi %6, %5 : vector<16x1xi32>
    %8 = vector.broadcast %c15_i32 : i32 to vector<16x1xi32>
    %9 = arith.minsi %8, %7 : vector<16x1xi32>
    %10 = tpu.iota {dimensions = array<i32: 1>} : vector<1x16xi32>
    %11 = vector.broadcast %10 : vector<1x16xi32> to vector<16x16xi32>
    %12 = vector.broadcast %9 : vector<16x1xi32> to vector<16x16xi32>
    %13 = arith.cmpi eq, %11, %12 : vector<16x16xi32>
    %14 = arith.extui %13 : vector<16x16xi1> to vector<16x16xi32>
    %15 = arith.sitofp %14 : vector<16x16xi32> to vector<16x16xf32>
    %c0_2 = arith.constant 0 : index
    %c0_3 = arith.constant 0 : index
    %16 = vector.load %arg2[%c0_2, %c0_3] : memref<16x32xf32, #tpu.memory_space<vmem>>, vector<16x32xf32>
    %cst_4 = arith.constant dense<0.000000e+00> : vector<16x32xf32>
    %17 = tpu.matmul %15, %16, %cst_4 {dimension_numbers = #tpu.dot_dimension_numbers<[1], [0], [0], [1], [0, 0, 1, 1], [], []>} : vector<16x16xf32>, vector<16x32xf32>, vector<16x32xf32> -> vector<16x32xf32>
    %c0_5 = arith.constant 0 : index
    %c0_6 = arith.constant 0 : index
    %18 = vector.load %arg3[%c0_5, %c0_6] : memref<16x32xf32, #tpu.memory_space<vmem>>, vector<16x32xf32>
    tpu.vector_store %arg3[%c0_5, %c0_6], %17 {strides = array<i32>} : memref<16x32xf32, #tpu.memory_space<vmem>>, vector<16x32xf32>,
    return
  }
  func.func @transform_0(%arg0: i32) -> (i32, i32) {
    %c0_i32 = arith.constant 0 : i32
    %c0_i32_0 = arith.constant 0 : i32
    return %arg0, %c0_i32 : i32, i32
  }
  func.func @transform_1(%arg0: i32) -> (i32, i32) {
    %c0_i32 = arith.constant 0 : i32
    %c0_i32_0 = arith.constant 0 : i32
    %c0_i32_1 = arith.constant 0 : i32
    return %c0_i32, %c0_i32_0 : i32, i32
  }
  func.func @transform_2(%arg0: i32) -> (i32, i32) {
    %c0_i32 = arith.constant 0 : i32
    %c0_i32_0 = arith.constant 0 : i32
    return %arg0, %c0_i32 : i32, i32
  }
}

</mosaic_0001>

<llo_original>
// kernel: tpu_custom_call.1
$region0: #{tpu_custom_call.1}
  #allocation0 [shape = 'u32[]', space=smem, size = 0x4, offset = 0x4, fixed_abs, tag = 'smem constant byte address 0x4 - core index']
  #allocation1 [shape = 'u32[144,128]{1,0:T(1,128)}', space=vmem, size = 0x12000, scoped, tag = 'internal scratch']
  %s0 = inlined_call_operand.vmem [shape: f32[48,1], index: 0, kind: input, shape index: {}]
  %s1 = inlined_call_operand.vmem [shape: f32[16,32], index: 1, kind: input, shape index: {}]
  %s2 = inlined_call_operand.vmem [shape: f32[48,32], index: 2, kind: output, shape index: {}]
  %s3 = sld [smem:[#allocation0]]
  $region41: #{tpu_custom_call.1} parent=0
    _
  %s5 = ssub.s32 1, %s3
  %s6 = scalar_select 0, %s5, %s3
  loop: start=0, step=1, limit=5
  $region2: #{tpu_custom_call.1} parent=0 // loop_pre_header
    _
  $region3: #{tpu_custom_call.1} parent=0 // loop_header
    %s8 = sphi 0, %s12
    %p9 = scmp.ge.s32.totalorder %s8, 5
    %s18 = sphi 0, %s20
    %s21 = sphi 0, %s18
    %s22 = sphi 0, %s21
    %s38 = sphi 0, %s22
    %s42 = sphi 0, %s42
    %s44 = sphi 0, %s42
    %s45 = sphi 0, %s44
    %s59 = sphi 0, %s45
    %s65 = sphi 0, %s67
    %s68 = sphi 0, %s65
    %s69 = sphi 0, %s68
    %s85 = sphi 0, %s69
  $region4: #{tpu_custom_call.1} parent=0 // loop_header_branch
    %11 = sbr.rel (%p9) target = $region8
  $region5: #{tpu_custom_call.1} parent=0 // loop_body
    %s13 = ssub.s32 %s8, 1
    %s14 = ssub.s32 %s8, 2
    %s15 = sadd.s32 %s8, 1
    %s16 = ssub.s32 %s8, %s15
    %p17 = scmp.eq.s32.totalorder %s16, 0
    %s19 = sadd.s32 %s18, 1
    %s20 = scalar_select %p17, %s18, %s19
    %p23 = pneg %p17
    %p24 = scmp.eq.s32.totalorder %s8, 2
    %p25 = por %p23, %p24
    %p26 = scmp.ne.s32.totalorder %s18, %s21
    %p27 = scmp.eq.s32.totalorder %s8, 0
    %p28 = por %p26, %p27
    %p29 = scmp.ne.s32.totalorder %s18, %s21
    %p30 = scmp.eq.s32.totalorder %s13, 2
    %p31 = por %p29, %p30
    %p32 = scmp.ne.s32.totalorder %s21, %s22
    %p33 = scmp.eq.s32.totalorder %s13, 0
    %p34 = por %p32, %p33
    %p35 = scmp.ne.s32.totalorder %s21, %s22
    %p36 = scmp.eq.s32.totalorder %s14, 2
    %p37 = por %p35, %p36
    %p39 = scmp.ne.s32.totalorder %s22, %s38
    %p40 = scmp.eq.s32.totalorder %s14, 0
    %p41 = por %p39, %p40
    %s43 = sadd.s32 %s42, 1
    %p46 = scmp.eq.s32.totalorder %s8, 2
    %p47 = scmp.ne.s32.totalorder %s42, %s44
    %p48 = scmp.eq.s32.totalorder %s8, 0
    %p49 = por %p47, %p48
    %p50 = scmp.ne.s32.totalorder %s42, %s44
    %p51 = scmp.eq.s32.totalorder %s13, 2
    %p52 = por %p50, %p51
    %p53 = scmp.ne.s32.totalorder %s44, %s45
    %p54 = scmp.eq.s32.totalorder %s13, 0
    %p55 = por %p53, %p54
    %p56 = scmp.ne.s32.totalorder %s44, %s45
    %p57 = scmp.eq.s32.totalorder %s14, 2
    %p58 = por %p56, %p57
    %p60 = scmp.ne.s32.totalorder %s45, %s59
    %p61 = scmp.eq.s32.totalorder %s14, 0
    %p62 = por %p60, %p61
    %s63 = ssub.s32 %s8, %s15
    %p64 = scmp.eq.s32.totalorder %s63, 0
    %s66 = sadd.s32 %s65, 1
    %s67 = scalar_select %p64, %s65, %s66
    %p70 = pneg %p64
    %p71 = scmp.eq.s32.totalorder %s8, 2
    %p72 = por %p70, %p71
    %p73 = scmp.ne.s32.totalorder %s65, %s68
    %p74 = scmp.eq.s32.totalorder %s8, 0
    %p75 = por %p73, %p74
    %p76 = scmp.ne.s32.totalorder %s65, %s68
    %p77 = scmp.eq.s32.totalorder %s13, 2
    %p78 = por %p76, %p77
    %p79 = scmp.ne.s32.totalorder %s68, %s69
    %p80 = scmp.eq.s32.totalorder %s13, 0
    %p81 = por %p79, %p80
    %p82 = scmp.ne.s32.totalorder %s68, %s69
    %p83 = scmp.eq.s32.totalorder %s14, 2
    %p84 = por %p82, %p83
    %p86 = scmp.ne.s32.totalorder %s69, %s85
    %p87 = scmp.eq.s32.totalorder %s14, 0
    %p88 = por %p86, %p87
    %p89 = scmp.le.s32.totalorder 1, %s8
    %p90 = scmp.lt.s32.totalorder %s8, 4
    %p91 = pnand %p89, %p90
    %p92 = pneg %p91
    // Predicated region
    $region9: #{tpu_custom_call.1} parent=5 // pred_check
      _
    $region10: #{tpu_custom_call.1} parent=5 // pred_check_branch
      %94 = sbr.rel (%p91) target = $region12
    $region11: #{tpu_custom_call.1} parent=5 // pred_region
      %s95 = ssub.s32 %s8, 1
      // Predicated region
      $region13: #{tpu_custom_call.1} parent=11 // pred_check
        %p96 = pneg %p55
      $region14: #{tpu_custom_call.1} parent=11 // pred_check_branch
        %98 = sbr.rel (%p96) target = $region16
      $region15: #{tpu_custom_call.1} parent=11 // pred_region
        _
      $region16: #{tpu_custom_call.1} parent=11 // pred_fallthru
        _
    $region12: #{tpu_custom_call.1} parent=5 // pred_fallthru
      _
    %p99 = scmp.lt.s32.totalorder %s8, 3
    // Predicated region
    $region17: #{tpu_custom_call.1} parent=5 // pred_check
      %p100 = pneg %p99
    $region18: #{tpu_custom_call.1} parent=5 // pred_check_branch
      %102 = sbr.rel (%p100) target = $region20
    $region19: #{tpu_custom_call.1} parent=5 // pred_region
      // Predicated region
      $region21: #{tpu_custom_call.1} parent=19 // pred_check
        %p103 = pneg %p28
      $region22: #{tpu_custom_call.1} parent=19 // pred_check_branch
        %105 = sbr.rel (%p103) target = $region24
      $region23: #{tpu_custom_call.1} parent=19 // pred_region
        %s106 = smul.u32 2, %s8
        %p107 = scmp.lt.s32.totalorder %s106, 5
        %s108 = scalar_select %p107, %s106, 5
        %s109 = smul.addr %s108, 8
        %s110 = scalar_lea.vmem %s0, %s109
        %s111 = smul.u32 2, %s8
      $region24: #{tpu_custom_call.1} parent=19 // pred_fallthru
        _
    $region20: #{tpu_custom_call.1} parent=5 // pred_fallthru
      _
    %p112 = scmp.le.s32.totalorder 1, %s8
    %p113 = scmp.lt.s32.totalorder %s8, 4
    %p114 = pnand %p112, %p113
    %p115 = pneg %p114
    // Predicated region
    $region25: #{tpu_custom_call.1} parent=5 // pred_check
      _
    $region26: #{tpu_custom_call.1} parent=5 // pred_check_branch
      %117 = sbr.rel (%p114) target = $region28
    $region27: #{tpu_custom_call.1} parent=5 // pred_region
      %s118 = ssub.s32 %s8, 1
      %s119 = smul.u32 2, %s13
      %p120 = scmp.lt.s32.totalorder %s119, 5
      %s121 = scalar_select %p120, %s119, 5
      %s122 = smul.addr %s121, 8
      %s123 = scalar_lea.vmem %s0, %s122
      %p124 = pneg %p34
      %p125 = pneg %p31
      %p126 = pneg %p55
      %p127 = pneg %p52
      %p128 = pneg %p81
      %p129 = pneg %p78
      %s130 = smul.u32 2, %s13
      %p131 = scmp.lt.s32.totalorder %s130, 5
      %s132 = scalar_select %p131, %s130, 5
      %s133 = smul.addr %s132, 8
      %s134 = scalar_lea.vmem %s2, %s133
      %s135 = smul.u32 2, %s13
      %p136 = scmp.lt.s32.totalorder %s135, 5
      %s137 = scalar_select %p136, %s135, 5
      %s138 = smul.addr %s137, 8
      %s139 = scalar_lea.vmem %s0, %s138
      %s140 = smul.u32 2, %s13
      %s141 = smul.u32 2, %s13
      %p142 = scmp.lt.s32.totalorder %s141, 5
      %s143 = scalar_select %p142, %s141, 5
      %s144 = smul.addr %s143, 8
      %s145 = scalar_lea.vmem %s2, %s144
      %s146 = smul.u32 2, %s13
      %v147 = vld [vmem:[%s139] sm:$0xff]
      %v148 = vld [vmem:[%s139 + $0x8] sm:$0xff]
      %v149 = vrcp.pop 100.0
      %v150 = vmul.f32 %v147, %v149
      %v151 = vmul.f32 %v148, %v149
      %v152 = vmul.f32 %v150, 15.0
      %v153 = vmul.f32 %v151, 15.0
      %v154 = vcvt.f32.s32.to.zero.pseudo %v152
      %v155 = vcvt.f32.s32.to.zero.pseudo %v153
      %vm156 = vcmp.gt.s32.totalorder %v154, 0
      %v157 = vsel %vm156, %v154, 0
      %vm158 = vcmp.gt.s32.totalorder %v155, 0
      %v159 = vsel %vm158, %v155, 0
      %vm160 = vcmp.lt.s32.totalorder %v157, 15
      %v161 = vsel %vm160, %v157, 15
      %vm162 = vcmp.lt.s32.totalorder %v159, 15
      %v163 = vsel %vm162, %v159, 15
      %v164 = vlaneseq
      %v165 = vand.u32 %v164, 127
      %166 = vset.pattern.permute.xlu0 0
      %167 = vperm.xlu0 %166, %v161
      %v168 = vpop.permute.xlu0 %167
      %169 = vset.pattern.permute.xlu0 0
      %170 = vperm.xlu0 %169, %v163
      %v171 = vpop.permute.xlu0 %170
      %vm172 = vcmp.eq.s32.totalorder %v165, %v168
      %vm173 = vcmp.eq.s32.totalorder %v165, %v171
      %v174 = vsel %vm172, 1, 0
      %v175 = vsel %vm173, 1, 0
      %v176 = vcvt.s32.f32 %v174
      %v177 = vcvt.s32.f32 %v175
      %v178 = vld [vmem:[%s1] sm:$0xff]
      %v179 = vld [vmem:[%s1 + $0x8] sm:$0xff]
      %vm180 = vcmask 130048
      %v182 = vsel %vm180, %v176, 0
      %v185 = vsel %vm180, %v177, 0
      %187 = vmatprep.subr.mxu0 0.0
      %188 = vmatpush1.msra.mxu0 %v178
      %189 = vmatprep.subr.mxu0 0.0
      %190 = vmatpush1.msra.mxu0 %v179
      %191 = vmatprep.subr.mxu0 0.0
      %192 = vmatpush1.msra.mxu0 0.0
      %193 = vmatprep.subr.mxu0 0.0
      %194 = vmatpush1.msra.mxu0 0.0
      %195 = vmatprep.subr.mxu0 0.0
      %196 = vmatpush1.msra.mxu0 0.0
      %197 = vmatprep.subr.mxu0 0.0
      %198 = vmatpush1.msra.mxu0 0.0
      %199 = vmatprep.subr.mxu0 0.0
      %200 = vmatpush1.msra.mxu0 0.0
      %201 = vmatprep.subr.mxu0 0.0
      %202 = vmatpush1.msra.mxu0 0.0
      %203 = vmatprep.subr.mxu0 0.0
      %204 = vmatpush1.msra.mxu0 0.0
      %205 = vmatprep.subr.mxu0 0.0
      %206 = vmatpush1.msra.mxu0 0.0
      %207 = vmatprep.subr.mxu0 0.0
      %208 = vmatpush1.msra.mxu0 0.0
      %209 = vmatprep.subr.mxu0 0.0
      %210 = vmatpush1.msra.mxu0 0.0
      %211 = vmatprep.subr.mxu0 0.0
      %212 = vmatpush1.msra.mxu0 0.0
      %213 = vmatprep.subr.mxu0 0.0
      %214 = vmatpush1.msra.mxu0 0.0
      %215 = vmatprep.subr.mxu0 0.0
      %216 = vmatpush1.msra.mxu0 0.0
      %217 = vmatprep.subr.mxu0 0.0
      %218 = vmatpush1.msra.mxu0 0.0
      %219 = vmatprep.subr.mxu0 0.0
      %220 = vmatpush1.msra.mxu0 0.0
      %221 = vmatprep.subr.mxu0 0.0
      %222 = vmatpush1.msra.mxu0 0.0
      %223 = vmatprep.subr.mxu0 0.0
      %224 = vmatpush1.msra.mxu0 0.0
      %225 = vmatprep.subr.mxu0 0.0
      %226 = vmatpush1.msra.mxu0 0.0
      %227 = vmatprep.subr.mxu0 0.0
      %228 = vmatpush1.msra.mxu0 0.0
      %229 = vmatprep.subr.mxu0 0.0
      %230 = vmatpush1.msra.mxu0 0.0
      %231 = vmatprep.subr.mxu0 0.0
      %232 = vmatpush1.msra.mxu0 0.0
      %233 = vmatprep.subr.mxu0 0.0
      %234 = vmatpush1.msra.mxu0 0.0
      %235 = vmatprep.subr.mxu0 0.0
      %236 = vmatpush1.msra.mxu0 0.0
      %237 = vmatprep.subr.mxu0 0.0
      %238 = vmatpush1.msra.mxu0 0.0
      %239 = vmatprep.subr.mxu0 0.0
      %240 = vmatpush1.msra.mxu0 0.0
      %241 = vmatprep.subr.mxu0 0.0
      %242 = vmatpush1.msra.mxu0 0.0
      %243 = vmatprep.subr.mxu0 0.0
      %244 = vmatpush1.msra.mxu0 0.0
      %245 = vmatprep.subr.mxu0 0.0
      %246 = vmatpush1.msra.mxu0 0.0
      %247 = vmatprep.subr.mxu0 0.0
      %248 = vmatpush1.msra.mxu0 0.0
      %249 = vmatprep.subr.mxu0 0.0
      %250 = vmatpush1.msra.mxu0 0.0
      %251 = vmatprep.mubr.f32.mxu0 0.0
      %252 = vmatmul.mubr.f32.gmra.mrb[0].mxu0 %v182
      %v253 = vpop.f32.mrb[0].mxu0
      %v254 = vadd.f32 0.0, %v253
      %v255 = vpop.f32.mrb[0].mxu0
      %256 = vmatprep.mubr.f32.mxu0 0.0
      %257 = vmatmul.mubr.f32.gmra.mrb[0].mxu0 %v185
      %v258 = vpop.f32.mrb[0].mxu0
      %v259 = vadd.f32 0.0, %v258
      %v260 = vpop.f32.mrb[0].mxu0
      %261 = vdwg.mxu0
      %vm262 = vcmask 261120
      %263 = vst.msk [vmem:[%s145] sm:$0xff] %vm262, %v254
      %264 = vst.msk [vmem:[%s145 + $0x8] sm:$0xff] %vm262, %v259
      %s265 = smul.u32 2, %s13
      %p266 = scmp.lt.s32.totalorder %s265, 5
      %s267 = scalar_select %p266, %s265, 5
      %s268 = smul.addr %s267, 8
      %s269 = scalar_lea.vmem %s2, %s268
      // Predicated region
      $region29: #{tpu_custom_call.1} parent=27 // pred_check
        %p270 = pneg %p78
      $region30: #{tpu_custom_call.1} parent=27 // pred_check_branch
        %272 = sbr.rel (%p270) target = $region32
      $region31: #{tpu_custom_call.1} parent=27 // pred_region
        %s273 = smul.u32 2, %s13
      $region32: #{tpu_custom_call.1} parent=27 // pred_fallthru
        _
    $region28: #{tpu_custom_call.1} parent=5 // pred_fallthru
      _
    %p274 = scmp.le.s32.totalorder 2, %s8
    // Predicated region
    $region33: #{tpu_custom_call.1} parent=5 // pred_check
      %p275 = pneg %p274
    $region34: #{tpu_custom_call.1} parent=5 // pred_check_branch
      %277 = sbr.rel (%p275) target = $region36
    $region35: #{tpu_custom_call.1} parent=5 // pred_region
      %s278 = ssub.s32 %s8, 2
      // Predicated region
      $region37: #{tpu_custom_call.1} parent=35 // pred_check
        %p279 = pneg %p84
      $region38: #{tpu_custom_call.1} parent=35 // pred_check_branch
        %281 = sbr.rel (%p279) target = $region40
      $region39: #{tpu_custom_call.1} parent=35 // pred_region
        %s282 = smul.u32 2, %s14
        %p283 = scmp.lt.s32.totalorder %s282, 5
        %s284 = scalar_select %p283, %s282, 5
        %s285 = smul.addr %s284, 8
        %s286 = scalar_lea.vmem %s2, %s285
      $region40: #{tpu_custom_call.1} parent=35 // pred_fallthru
        _
    $region36: #{tpu_custom_call.1} parent=5 // pred_fallthru
      _
  $region6: #{tpu_custom_call.1} parent=0 // loop_footer
    %s12 = sadd.s32 1, %s8
  $region7: #{tpu_custom_call.1} parent=0 // loop_footer_branch
    %7 = sbr.rel target = $region3
  $region8: #{tpu_custom_call.1} parent=0 // loop_exit
    _

</llo_original>
